<compile_context>
chip_gen: v5e
topology: v5e:2x2
jax: 0.10.0
libtpu: 0.0.40
codegen_flags: <defaults>
</compile_context>

<pallas_src>
import functools

import jax
import jax.numpy as jnp
from jax.experimental import pallas as pl
from jax.experimental.pallas import tpu as pltpu

_BN_EPS = 1e-5
_LRELU_SLOPE = 0.1
_MXU_DTYPE = jnp.bfloat16       # conv-matmul operand dtype (accumulation stays f32)


def _fused_block_kernel(x_ref, m_ref, mask_ref, gb_ref, o_ref, im2col_ref,
                        *, B, C, H, W):
    """Fused (conv3x3 -> BN(train) -> LeakyReLU) x 2, lane-dense layout.

    x_ref:      (C, B*H*W)    input; row = channel, lanes = flattened (b, h, w)
    m_ref:      (2, C, 9*C)   per-stage im2col conv weights, bf16, batch-independent
    mask_ref:   (9, B*H*W)    per-tap validity masks (implement the zero padding)
    gb_ref:     (C, 4)        packed BN affine params: columns [g1, beta1, g2, beta2]
    o_ref:      (C, B*H*W)    output
    im2col_ref: (9*C, B*H*W)  VMEM scratch: tap-stacked shifted planes (f32)
    """
    L = B * H * W
    inv_n = 1.0 / float(L)               # BN stats are over (B, H, W) = all lanes
    masks = mask_ref[...]                 # (9, L)  f32
    gb = gb_ref[...]                       # (C, 4) f32

    def stage(x2d, m2d, gamma, beta):
        # --- im2col via lane rolls (XLU) + edge masks (VPU, f32); built once,
        #     then ONE MXU matmul per stage with bf16 operands / f32 accumulation.
        for t in range(9):
            oy, ox = t // 3 - 1, t % 3 - 1
            d = oy * W + ox                              # flat-lane offset of tap t
            shifted = x2d if d == 0 else pltpu.roll(x2d, shift=(-d) % L, axis=1)
            # Center tap is always in-bounds: skip its all-ones mask multiply.
            tap = shifted if t == 4 else shifted * masks[t:t + 1, :]
            im2col_ref[t * C:(t + 1) * C, :] = tap

        acc = jnp.dot(m2d, im2col_ref[...].astype(_MXU_DTYPE),
                      preferred_element_type=jnp.float32)          # (C, L) f32

        # --- BatchNorm2d (training stats): per-channel stats are plain row
        #     reductions over the lane axis (single pass, f32), folded with the
        #     affine transform into one scale/shift pass. ---
        mean = jnp.sum(acc, axis=1, keepdims=True) * inv_n          # (C, 1)
        ex2 = jnp.sum(acc * acc, axis=1, keepdims=True) * inv_n
        var = ex2 - mean * mean                                     # biased variance
        scale = gamma * jax.lax.rsqrt(var + _BN_EPS)
        shift = beta - mean * scale
        y = acc * scale + shift
        # --- LeakyReLU(0.1) ---
        return jnp.maximum(y, _LRELU_SLOPE * y)

    y1 = stage(x_ref[...], m_ref[0], gb[:, 0:1], gb[:, 1:2])   # stage-1 stays on-chip
    y2 = stage(y1, m_ref[1], gb[:, 2:3], gb[:, 3:4])
    o_ref[...] = y2


def _pack_params(params, C):
    """Pack conv weights (bf16) and BN affine params (f32) into two operands."""

    def conv_mat(w_hwio):
        # (3, 3, Cin, Cout) -> (Cout, 9*Cin); column index = t*C + ci, tap t = dy*3+dx.
        w_taps = w_hwio.astype(jnp.float32).reshape(9, C, C)        # [t, ci, co]
        return jnp.transpose(w_taps, (2, 0, 1)).reshape(C, 9 * C)   # [co, t*C+ci]

    m = jnp.stack([conv_mat(params["w1_hwio"]),
                   conv_mat(params["w2_hwio"])]).astype(_MXU_DTYPE)  # (2, C, 9C)
    gb = jnp.stack([params["g1"], params["beta1"],
                    params["g2"], params["beta2"]], axis=1).astype(jnp.float32)  # (C, 4)
    return m, gb


def _make_masks(B, H, W):
    """Per-tap validity masks over the flattened (b, h, w) lane axis."""
    hh = jnp.arange(H)[:, None]
    ww = jnp.arange(W)[None, :]
    rows = []
    for t in range(9):
        oy, ox = t // 3 - 1, t % 3 - 1
        valid = (hh + oy >= 0) & (hh + oy < H) & (ww + ox >= 0) & (ww + ox < W)
        rows.append(jnp.tile(valid.reshape(-1), B))
    return jnp.stack(rows).astype(jnp.float32)                      # (9, B*H*W)


@jax.jit
def discriminator_usual_block(x_nchw, params):
    """Matches DiscriminatorUsualBlock.forward (training-mode BatchNorm)."""
    B, C, H, W = x_nchw.shape
    L = B * H * W
    # Channels on sublanes; (batch, h, w) flattened on the 128-lane axis.
    x2d = jnp.transpose(x_nchw, (1, 0, 2, 3)).astype(jnp.float32).reshape(C, L)
    m, gb = _pack_params(params, C)
    masks = _make_masks(B, H, W)

    kernel = functools.partial(_fused_block_kernel, B=B, C=C, H=H, W=W)
    out2d = pl.pallas_call(
        kernel,
        out_shape=jax.ShapeDtypeStruct((C, L), jnp.float32),
        grid=(1,),
        in_specs=[
            pl.BlockSpec((C, L), lambda i: (0, 0)),
            pl.BlockSpec((2, C, 9 * C), lambda i: (0, 0, 0)),
            pl.BlockSpec((9, L), lambda i: (0, 0)),
            pl.BlockSpec((C, 4), lambda i: (0, 0)),
        ],
        out_specs=pl.BlockSpec((C, L), lambda i: (0, 0)),
        scratch_shapes=[pltpu.VMEM((9 * C, L), jnp.float32)],
        compiler_params=pltpu.CompilerParams(dimension_semantics=("arbitrary",)),
    )(x2d, m, masks, gb)
    return jnp.transpose(out2d.reshape(C, B, H, W), (1, 0, 2, 3))


def init_params(key, nf):
    ks = jax.random.split(key, 8)
    # Conv weights generated directly in HWIO (dy, dx, ci, co); PyTorch's
    # (co, ci, dy, dx) weight W maps via W.transpose(2, 3, 1, 0).
    return {
        "w1_hwio": jax.random.normal(ks[0], (3, 3, nf, nf), jnp.float32) * 0.1,
        "b1": jax.random.normal(ks[2], (nf,), jnp.float32) * 0.1,
        "g1": 1.0 + jax.random.normal(ks[3], (nf,), jnp.float32) * 0.1,
        "beta1": jax.random.normal(ks[4], (nf,), jnp.float32) * 0.1,
        "w2_hwio": jax.random.normal(ks[1], (3, 3, nf, nf), jnp.float32) * 0.1,
        "b2": jax.random.normal(ks[5], (nf,), jnp.float32) * 0.1,
        "g2": 1.0 + jax.random.normal(ks[6], (nf,), jnp.float32) * 0.1,
        "beta2": jax.random.normal(ks[7], (nf,), jnp.float32) * 0.1,
    }


def reference_block(x_nchw, params):
    """Pure-JAX reference (same math as the PyTorch module in train mode)."""
    x = jnp.transpose(x_nchw, (0, 2, 3, 1)).astype(jnp.float32)

    def step(x, w_hwio, b, g, be):
        y = jax.lax.conv_general_dilated(
            x, w_hwio, window_strides=(1, 1), padding="SAME",
            dimension_numbers=("NHWC", "HWIO", "NHWC")) + b
        mean = jnp.mean(y, axis=(0, 1, 2), keepdims=True)
        var = jnp.mean((y - mean) ** 2, axis=(0, 1, 2), keepdims=True)
        y = (y - mean) / jnp.sqrt(var + _BN_EPS) * g + be
        return jnp.where(y >= 0, y, _LRELU_SLOPE * y)

    x = step(x, params["w1_hwio"], params["b1"], params["g1"], params["beta1"])
    x = step(x, params["w2_hwio"], params["b2"], params["g2"], params["beta2"])
    return jnp.transpose(x, (0, 3, 1, 2))


if __name__ == "__main__":
    key = jax.random.PRNGKey(0)
    k_x, k_p = jax.random.split(key)

    nf = 4                      # channels (nf)
    B, H, W = 2, 16, 16
    x = jax.random.normal(k_x, (B, nf, H, W), jnp.float32)   # NCHW like PyTorch

    params = init_params(k_p, nf)

    out = jax.block_until_ready(discriminator_usual_block(x, params))
    assert out.shape == (B, nf, H, W)

    ref = reference_block(x, params)
    max_err = float(jnp.max(jnp.abs(out - ref)))
    # bf16 MXU operands (f32 accumulation / BN stats) -> tolerance loosened vs f32.
    assert max_err < 5e-2, f"mismatch vs reference: {max_err}"

    print("KERNEL_OK")
</pallas_src>

<mosaic_0001>
module attributes {stable_mosaic.version = 11 : i64} {
  func.func @_fused_block_kernel(%arg0: i32, %arg1: memref<4x512xf32, #tpu.memory_space<vmem>>, %arg2: memref<2x4x36xbf16, #tpu.memory_space<vmem>>, %arg3: memref<9x512xf32, #tpu.memory_space<vmem>>, %arg4: memref<4x4xf32, #tpu.memory_space<vmem>>, %arg5: memref<4x512xf32, #tpu.memory_space<vmem>>, %arg6: memref<36x512xf32, #tpu.memory_space<vmem>>) attributes {dimension_semantics = [#tpu.dimension_semantics<arbitrary>], iteration_bounds = array<i64: 1>, scalar_prefetch = 0 : i64, scratch_operands = 1 : i64, tpu.core_type = #tpu.core_type<tc>, window_params = [{pipeline_mode = #tpu.pipeline_mode<synchronous>, transform_indices = @transform_0, window_bounds = array<i64: 4, 512>}, {pipeline_mode = #tpu.pipeline_mode<synchronous>, transform_indices = @transform_1, window_bounds = array<i64: 2, 4, 36>}, {pipeline_mode = #tpu.pipeline_mode<synchronous>, transform_indices = @transform_2, window_bounds = array<i64: 9, 512>}, {pipeline_mode = #tpu.pipeline_mode<synchronous>, transform_indices = @transform_3, window_bounds = array<i64: 4, 4>}, {pipeline_mode = #tpu.pipeline_mode<synchronous>, transform_indices = @transform_4, window_bounds = array<i64: 4, 512>}]} {
    %c0 = arith.constant 0 : index
    %c0_0 = arith.constant 0 : index
    %0 = vector.load %arg3[%c0, %c0_0] : memref<9x512xf32, #tpu.memory_space<vmem>>, vector<9x512xf32>
    %c0_1 = arith.constant 0 : index
    %c0_2 = arith.constant 0 : index
    %1 = vector.load %arg4[%c0_1, %c0_2] : memref<4x4xf32, #tpu.memory_space<vmem>>, vector<4x4xf32>
    %c0_3 = arith.constant 0 : index
    %c0_4 = arith.constant 0 : index
    %2 = vector.load %arg1[%c0_3, %c0_4] : memref<4x512xf32, #tpu.memory_space<vmem>>, vector<4x512xf32>
    %c0_5 = arith.constant 0 : index
    %c0_6 = arith.constant 0 : index
    %c0_7 = arith.constant 0 : index
    %3 = vector.load %arg2[%c0_5, %c0_6, %c0_7] : memref<2x4x36xbf16, #tpu.memory_space<vmem>>, vector<1x4x36xbf16>
    %4 = vector.shape_cast %3 : vector<1x4x36xbf16> to vector<4x36xbf16>
    %5 = vector.extract_strided_slice %1 {offsets = [0, 0], sizes = [4, 1], strides = [1, 1]} : vector<4x4xf32> to vector<4x1xf32>
    %6 = vector.extract_strided_slice %1 {offsets = [0, 1], sizes = [4, 1], strides = [1, 1]} : vector<4x4xf32> to vector<4x1xf32>
    %c17_i32 = arith.constant 17 : i32
    %7 = tpu.dynamic_rotate %2 by %c17_i32 dim 1 : vector<4x512xf32>, i32 -> vector<4x512xf32>
    %8 = vector.extract_strided_slice %0 {offsets = [0, 0], sizes = [1, 512], strides = [1, 1]} : vector<9x512xf32> to vector<1x512xf32>
    %9 = vector.broadcast %8 : vector<1x512xf32> to vector<4x512xf32>
    %10 = arith.mulf %7, %9 : vector<4x512xf32>
    %c0_8 = arith.constant 0 : index
    %c0_9 = arith.constant 0 : index
    %11 = vector.load %arg6[%c0_8, %c0_9] : memref<36x512xf32, #tpu.memory_space<vmem>>, vector<4x512xf32>
    tpu.vector_store %arg6[%c0_8, %c0_9], %10 {strides = array<i32>} : memref<36x512xf32, #tpu.memory_space<vmem>>, vector<4x512xf32>,
    %c16_i32 = arith.constant 16 : i32
    %12 = tpu.dynamic_rotate %2 by %c16_i32 dim 1 : vector<4x512xf32>, i32 -> vector<4x512xf32>
    %13 = vector.extract_strided_slice %0 {offsets = [1, 0], sizes = [1, 512], strides = [1, 1]} : vector<9x512xf32> to vector<1x512xf32>
    %14 = vector.broadcast %13 : vector<1x512xf32> to vector<4x512xf32>
    %15 = arith.mulf %12, %14 : vector<4x512xf32>
    %c4 = arith.constant 4 : index
    %c0_10 = arith.constant 0 : index
    %16 = vector.load %arg6[%c4, %c0_10] : memref<36x512xf32, #tpu.memory_space<vmem>>, vector<4x512xf32>
    tpu.vector_store %arg6[%c4, %c0_10], %15 {strides = array<i32>} : memref<36x512xf32, #tpu.memory_space<vmem>>, vector<4x512xf32>,
    %c15_i32 = arith.constant 15 : i32
    %17 = tpu.dynamic_rotate %2 by %c15_i32 dim 1 : vector<4x512xf32>, i32 -> vector<4x512xf32>
    %18 = vector.extract_strided_slice %0 {offsets = [2, 0], sizes = [1, 512], strides = [1, 1]} : vector<9x512xf32> to vector<1x512xf32>
    %19 = vector.broadcast %18 : vector<1x512xf32> to vector<4x512xf32>
    %20 = arith.mulf %17, %19 : vector<4x512xf32>
    %c8 = arith.constant 8 : index
    %c0_11 = arith.constant 0 : index
    %21 = vector.load %arg6[%c8, %c0_11] : memref<36x512xf32, #tpu.memory_space<vmem>>, vector<4x512xf32>
    tpu.vector_store %arg6[%c8, %c0_11], %20 {strides = array<i32>} : memref<36x512xf32, #tpu.memory_space<vmem>>, vector<4x512xf32>,
    %c1_i32 = arith.constant 1 : i32
    %22 = tpu.dynamic_rotate %2 by %c1_i32 dim 1 : vector<4x512xf32>, i32 -> vector<4x512xf32>
    %23 = vector.extract_strided_slice %0 {offsets = [3, 0], sizes = [1, 512], strides = [1, 1]} : vector<9x512xf32> to vector<1x512xf32>
    %24 = vector.broadcast %23 : vector<1x512xf32> to vector<4x512xf32>
    %25 = arith.mulf %22, %24 : vector<4x512xf32>
    %c12 = arith.constant 12 : index
    %c0_12 = arith.constant 0 : index
    %26 = vector.load %arg6[%c12, %c0_12] : memref<36x512xf32, #tpu.memory_space<vmem>>, vector<4x512xf32>
    tpu.vector_store %arg6[%c12, %c0_12], %25 {strides = array<i32>} : memref<36x512xf32, #tpu.memory_space<vmem>>, vector<4x512xf32>,
    %c16 = arith.constant 16 : index
    %c0_13 = arith.constant 0 : index
    %27 = vector.load %arg6[%c16, %c0_13] : memref<36x512xf32, #tpu.memory_space<vmem>>, vector<4x512xf32>
    tpu.vector_store %arg6[%c16, %c0_13], %2 {strides = array<i32>} : memref<36x512xf32, #tpu.memory_space<vmem>>, vector<4x512xf32>,
    %c511_i32 = arith.constant 511 : i32
    %28 = tpu.dynamic_rotate %2 by %c511_i32 dim 1 : vector<4x512xf32>, i32 -> vector<4x512xf32>
    %29 = vector.extract_strided_slice %0 {offsets = [5, 0], sizes = [1, 512], strides = [1, 1]} : vector<9x512xf32> to vector<1x512xf32>
    %30 = vector.broadcast %29 : vector<1x512xf32> to vector<4x512xf32>
    %31 = arith.mulf %28, %30 : vector<4x512xf32>
    %c20 = arith.constant 20 : index
    %c0_14 = arith.constant 0 : index
    %32 = vector.load %arg6[%c20, %c0_14] : memref<36x512xf32, #tpu.memory_space<vmem>>, vector<4x512xf32>
    tpu.vector_store %arg6[%c20, %c0_14], %31 {strides = array<i32>} : memref<36x512xf32, #tpu.memory_space<vmem>>, vector<4x512xf32>,
    %c497_i32 = arith.constant 497 : i32
    %33 = tpu.dynamic_rotate %2 by %c497_i32 dim 1 : vector<4x512xf32>, i32 -> vector<4x512xf32>
    %34 = vector.extract_strided_slice %0 {offsets = [6, 0], sizes = [1, 512], strides = [1, 1]} : vector<9x512xf32> to vector<1x512xf32>
    %35 = vector.broadcast %34 : vector<1x512xf32> to vector<4x512xf32>
    %36 = arith.mulf %33, %35 : vector<4x512xf32>
    %c24 = arith.constant 24 : index
    %c0_15 = arith.constant 0 : index
    %37 = vector.load %arg6[%c24, %c0_15] : memref<36x512xf32, #tpu.memory_space<vmem>>, vector<4x512xf32>
    tpu.vector_store %arg6[%c24, %c0_15], %36 {strides = array<i32>} : memref<36x512xf32, #tpu.memory_space<vmem>>, vector<4x512xf32>,
    %c496_i32 = arith.constant 496 : i32
    %38 = tpu.dynamic_rotate %2 by %c496_i32 dim 1 : vector<4x512xf32>, i32 -> vector<4x512xf32>
    %39 = vector.extract_strided_slice %0 {offsets = [7, 0], sizes = [1, 512], strides = [1, 1]} : vector<9x512xf32> to vector<1x512xf32>
    %40 = vector.broadcast %39 : vector<1x512xf32> to vector<4x512xf32>
    %41 = arith.mulf %38, %40 : vector<4x512xf32>
    %c28 = arith.constant 28 : index
    %c0_16 = arith.constant 0 : index
    %42 = vector.load %arg6[%c28, %c0_16] : memref<36x512xf32, #tpu.memory_space<vmem>>, vector<4x512xf32>
    tpu.vector_store %arg6[%c28, %c0_16], %41 {strides = array<i32>} : memref<36x512xf32, #tpu.memory_space<vmem>>, vector<4x512xf32>,
    %c495_i32 = arith.constant 495 : i32
    %43 = tpu.dynamic_rotate %2 by %c495_i32 dim 1 : vector<4x512xf32>, i32 -> vector<4x512xf32>
    %44 = vector.extract_strided_slice %0 {offsets = [8, 0], sizes = [1, 512], strides = [1, 1]} : vector<9x512xf32> to vector<1x512xf32>
    %45 = vector.broadcast %44 : vector<1x512xf32> to vector<4x512xf32>
    %46 = arith.mulf %43, %45 : vector<4x512xf32>
    %c32 = arith.constant 32 : index
    %c0_17 = arith.constant 0 : index
    %47 = vector.load %arg6[%c32, %c0_17] : memref<36x512xf32, #tpu.memory_space<vmem>>, vector<4x512xf32>
    tpu.vector_store %arg6[%c32, %c0_17], %46 {strides = array<i32>} : memref<36x512xf32, #tpu.memory_space<vmem>>, vector<4x512xf32>,
    %c0_18 = arith.constant 0 : index
    %c0_19 = arith.constant 0 : index
    %48 = vector.load %arg6[%c0_18, %c0_19] : memref<36x512xf32, #tpu.memory_space<vmem>>, vector<36x512xf32>
    %49 = arith.truncf %48 : vector<36x512xf32> to vector<36x512xbf16>
    %cst = arith.constant dense<0.000000e+00> : vector<4x512xf32>
    %50 = tpu.matmul %4, %49, %cst {dimension_numbers = #tpu.dot_dimension_numbers<[1], [0], [0], [1], [0, 0, 1, 1], [], []>} : vector<4x36xbf16>, vector<36x512xbf16>, vector<4x512xf32> -> vector<4x512xf32>
    %cst_20 = arith.constant dense<0.000000e+00> : vector<4xf32>
    %51 = vector.multi_reduction <add>, %50, %cst_20 [1] : vector<4x512xf32> to vector<4xf32>
    %52 = vector.shape_cast %51 : vector<4xf32> to vector<4x1xf32>
    %cst_21 = arith.constant 0.001953125 : f32
    %53 = vector.broadcast %cst_21 : f32 to vector<4x1xf32>
    %54 = arith.mulf %52, %53 : vector<4x1xf32>
    %55 = arith.mulf %50, %50 : vector<4x512xf32>
    %cst_22 = arith.constant dense<0.000000e+00> : vector<4xf32>
    %56 = vector.multi_reduction <add>, %55, %cst_22 [1] : vector<4x512xf32> to vector<4xf32>
    %57 = vector.shape_cast %56 : vector<4xf32> to vector<4x1xf32>
    %cst_23 = arith.constant 0.001953125 : f32
    %58 = vector.broadcast %cst_23 : f32 to vector<4x1xf32>
    %59 = arith.mulf %57, %58 : vector<4x1xf32>
    %60 = arith.mulf %54, %54 : vector<4x1xf32>
    %61 = arith.subf %59, %60 : vector<4x1xf32>
    %cst_24 = arith.constant 9.99999974E-6 : f32
    %62 = vector.broadcast %cst_24 : f32 to vector<4x1xf32>
    %63 = arith.addf %61, %62 : vector<4x1xf32>
    %64 = math.rsqrt %63 : vector<4x1xf32>
    %65 = arith.mulf %5, %64 : vector<4x1xf32>
    %66 = arith.mulf %54, %65 : vector<4x1xf32>
    %67 = arith.subf %6, %66 : vector<4x1xf32>
    %68 = vector.broadcast %65 : vector<4x1xf32> to vector<4x512xf32>
    %69 = arith.mulf %50, %68 : vector<4x512xf32>
    %70 = vector.broadcast %67 : vector<4x1xf32> to vector<4x512xf32>
    %71 = arith.addf %69, %70 : vector<4x512xf32>
    %cst_25 = arith.constant 1.000000e-01 : f32
    %72 = vector.broadcast %cst_25 : f32 to vector<4x512xf32>
    %73 = arith.mulf %72, %71 : vector<4x512xf32>
    %74 = arith.maximumf %71, %73 : vector<4x512xf32>
    %c1 = arith.constant 1 : index
    %c0_26 = arith.constant 0 : index
    %c0_27 = arith.constant 0 : index
    %75 = vector.load %arg2[%c1, %c0_26, %c0_27] : memref<2x4x36xbf16, #tpu.memory_space<vmem>>, vector<1x4x36xbf16>
    %76 = vector.shape_cast %75 : vector<1x4x36xbf16> to vector<4x36xbf16>
    %77 = vector.extract_strided_slice %1 {offsets = [0, 2], sizes = [4, 1], strides = [1, 1]} : vector<4x4xf32> to vector<4x1xf32>
    %78 = vector.extract_strided_slice %1 {offsets = [0, 3], sizes = [4, 1], strides = [1, 1]} : vector<4x4xf32> to vector<4x1xf32>
    %c17_i32_28 = arith.constant 17 : i32
    %79 = tpu.dynamic_rotate %74 by %c17_i32_28 dim 1 : vector<4x512xf32>, i32 -> vector<4x512xf32>
    %80 = vector.extract_strided_slice %0 {offsets = [0, 0], sizes = [1, 512], strides = [1, 1]} : vector<9x512xf32> to vector<1x512xf32>
    %81 = vector.broadcast %80 : vector<1x512xf32> to vector<4x512xf32>
    %82 = arith.mulf %79, %81 : vector<4x512xf32>
    %c0_29 = arith.constant 0 : index
    %c0_30 = arith.constant 0 : index
    %83 = vector.load %arg6[%c0_29, %c0_30] : memref<36x512xf32, #tpu.memory_space<vmem>>, vector<4x512xf32>
    tpu.vector_store %arg6[%c0_29, %c0_30], %82 {strides = array<i32>} : memref<36x512xf32, #tpu.memory_space<vmem>>, vector<4x512xf32>,
    %c16_i32_31 = arith.constant 16 : i32
    %84 = tpu.dynamic_rotate %74 by %c16_i32_31 dim 1 : vector<4x512xf32>, i32 -> vector<4x512xf32>
    %85 = vector.extract_strided_slice %0 {offsets = [1, 0], sizes = [1, 512], strides = [1, 1]} : vector<9x512xf32> to vector<1x512xf32>
    %86 = vector.broadcast %85 : vector<1x512xf32> to vector<4x512xf32>
    %87 = arith.mulf %84, %86 : vector<4x512xf32>
    %c4_32 = arith.constant 4 : index
    %c0_33 = arith.constant 0 : index
    %88 = vector.load %arg6[%c4_32, %c0_33] : memref<36x512xf32, #tpu.memory_space<vmem>>, vector<4x512xf32>
    tpu.vector_store %arg6[%c4_32, %c0_33], %87 {strides = array<i32>} : memref<36x512xf32, #tpu.memory_space<vmem>>, vector<4x512xf32>,
    %c15_i32_34 = arith.constant 15 : i32
    %89 = tpu.dynamic_rotate %74 by %c15_i32_34 dim 1 : vector<4x512xf32>, i32 -> vector<4x512xf32>
    %90 = vector.extract_strided_slice %0 {offsets = [2, 0], sizes = [1, 512], strides = [1, 1]} : vector<9x512xf32> to vector<1x512xf32>
    %91 = vector.broadcast %90 : vector<1x512xf32> to vector<4x512xf32>
    %92 = arith.mulf %89, %91 : vector<4x512xf32>
    %c8_35 = arith.constant 8 : index
    %c0_36 = arith.constant 0 : index
    %93 = vector.load %arg6[%c8_35, %c0_36] : memref<36x512xf32, #tpu.memory_space<vmem>>, vector<4x512xf32>
    tpu.vector_store %arg6[%c8_35, %c0_36], %92 {strides = array<i32>} : memref<36x512xf32, #tpu.memory_space<vmem>>, vector<4x512xf32>,
    %c1_i32_37 = arith.constant 1 : i32
    %94 = tpu.dynamic_rotate %74 by %c1_i32_37 dim 1 : vector<4x512xf32>, i32 -> vector<4x512xf32>
    %95 = vector.extract_strided_slice %0 {offsets = [3, 0], sizes = [1, 512], strides = [1, 1]} : vector<9x512xf32> to vector<1x512xf32>
    %96 = vector.broadcast %95 : vector<1x512xf32> to vector<4x512xf32>
    %97 = arith.mulf %94, %96 : vector<4x512xf32>
    %c12_38 = arith.constant 12 : index
    %c0_39 = arith.constant 0 : index
    %98 = vector.load %arg6[%c12_38, %c0_39] : memref<36x512xf32, #tpu.memory_space<vmem>>, vector<4x512xf32>
    tpu.vector_store %arg6[%c12_38, %c0_39], %97 {strides = array<i32>} : memref<36x512xf32, #tpu.memory_space<vmem>>, vector<4x512xf32>,
    %c16_40 = arith.constant 16 : index
    %c0_41 = arith.constant 0 : index
    %99 = vector.load %arg6[%c16_40, %c0_41] : memref<36x512xf32, #tpu.memory_space<vmem>>, vector<4x512xf32>
    tpu.vector_store %arg6[%c16_40, %c0_41], %74 {strides = array<i32>} : memref<36x512xf32, #tpu.memory_space<vmem>>, vector<4x512xf32>,
    %c511_i32_42 = arith.constant 511 : i32
    %100 = tpu.dynamic_rotate %74 by %c511_i32_42 dim 1 : vector<4x512xf32>, i32 -> vector<4x512xf32>
    %101 = vector.extract_strided_slice %0 {offsets = [5, 0], sizes = [1, 512], strides = [1, 1]} : vector<9x512xf32> to vector<1x512xf32>
    %102 = vector.broadcast %101 : vector<1x512xf32> to vector<4x512xf32>
    %103 = arith.mulf %100, %102 : vector<4x512xf32>
    %c20_43 = arith.constant 20 : index
    %c0_44 = arith.constant 0 : index
    %104 = vector.load %arg6[%c20_43, %c0_44] : memref<36x512xf32, #tpu.memory_space<vmem>>, vector<4x512xf32>
    tpu.vector_store %arg6[%c20_43, %c0_44], %103 {strides = array<i32>} : memref<36x512xf32, #tpu.memory_space<vmem>>, vector<4x512xf32>,
    %c497_i32_45 = arith.constant 497 : i32
    %105 = tpu.dynamic_rotate %74 by %c497_i32_45 dim 1 : vector<4x512xf32>, i32 -> vector<4x512xf32>
    %106 = vector.extract_strided_slice %0 {offsets = [6, 0], sizes = [1, 512], strides = [1, 1]} : vector<9x512xf32> to vector<1x512xf32>
    %107 = vector.broadcast %106 : vector<1x512xf32> to vector<4x512xf32>
    %108 = arith.mulf %105, %107 : vector<4x512xf32>
    %c24_46 = arith.constant 24 : index
    %c0_47 = arith.constant 0 : index
    %109 = vector.load %arg6[%c24_46, %c0_47] : memref<36x512xf32, #tpu.memory_space<vmem>>, vector<4x512xf32>
    tpu.vector_store %arg6[%c24_46, %c0_47], %108 {strides = array<i32>} : memref<36x512xf32, #tpu.memory_space<vmem>>, vector<4x512xf32>,
    %c496_i32_48 = arith.constant 496 : i32
    %110 = tpu.dynamic_rotate %74 by %c496_i32_48 dim 1 : vector<4x512xf32>, i32 -> vector<4x512xf32>
    %111 = vector.extract_strided_slice %0 {offsets = [7, 0], sizes = [1, 512], strides = [1, 1]} : vector<9x512xf32> to vector<1x512xf32>
    %112 = vector.broadcast %111 : vector<1x512xf32> to vector<4x512xf32>
    %113 = arith.mulf %110, %112 : vector<4x512xf32>
    %c28_49 = arith.constant 28 : index
    %c0_50 = arith.constant 0 : index
    %114 = vector.load %arg6[%c28_49, %c0_50] : memref<36x512xf32, #tpu.memory_space<vmem>>, vector<4x512xf32>
    tpu.vector_store %arg6[%c28_49, %c0_50], %113 {strides = array<i32>} : memref<36x512xf32, #tpu.memory_space<vmem>>, vector<4x512xf32>,
    %c495_i32_51 = arith.constant 495 : i32
    %115 = tpu.dynamic_rotate %74 by %c495_i32_51 dim 1 : vector<4x512xf32>, i32 -> vector<4x512xf32>
    %116 = vector.extract_strided_slice %0 {offsets = [8, 0], sizes = [1, 512], strides = [1, 1]} : vector<9x512xf32> to vector<1x512xf32>
    %117 = vector.broadcast %116 : vector<1x512xf32> to vector<4x512xf32>
    %118 = arith.mulf %115, %117 : vector<4x512xf32>
    %c32_52 = arith.constant 32 : index
    %c0_53 = arith.constant 0 : index
    %119 = vector.load %arg6[%c32_52, %c0_53] : memref<36x512xf32, #tpu.memory_space<vmem>>, vector<4x512xf32>
    tpu.vector_store %arg6[%c32_52, %c0_53], %118 {strides = array<i32>} : memref<36x512xf32, #tpu.memory_space<vmem>>, vector<4x512xf32>,
    %c0_54 = arith.constant 0 : index
    %c0_55 = arith.constant 0 : index
    %120 = vector.load %arg6[%c0_54, %c0_55] : memref<36x512xf32, #tpu.memory_space<vmem>>, vector<36x512xf32>
    %121 = arith.truncf %120 : vector<36x512xf32> to vector<36x512xbf16>
    %cst_56 = arith.constant dense<0.000000e+00> : vector<4x512xf32>
    %122 = tpu.matmul %76, %121, %cst_56 {dimension_numbers = #tpu.dot_dimension_numbers<[1], [0], [0], [1], [0, 0, 1, 1], [], []>} : vector<4x36xbf16>, vector<36x512xbf16>, vector<4x512xf32> -> vector<4x512xf32>
    %cst_57 = arith.constant dense<0.000000e+00> : vector<4xf32>
    %123 = vector.multi_reduction <add>, %122, %cst_57 [1] : vector<4x512xf32> to vector<4xf32>
    %124 = vector.shape_cast %123 : vector<4xf32> to vector<4x1xf32>
    %cst_58 = arith.constant 0.001953125 : f32
    %125 = vector.broadcast %cst_58 : f32 to vector<4x1xf32>
    %126 = arith.mulf %124, %125 : vector<4x1xf32>
    %127 = arith.mulf %122, %122 : vector<4x512xf32>
    %cst_59 = arith.constant dense<0.000000e+00> : vector<4xf32>
    %128 = vector.multi_reduction <add>, %127, %cst_59 [1] : vector<4x512xf32> to vector<4xf32>
    %129 = vector.shape_cast %128 : vector<4xf32> to vector<4x1xf32>
    %cst_60 = arith.constant 0.001953125 : f32
    %130 = vector.broadcast %cst_60 : f32 to vector<4x1xf32>
    %131 = arith.mulf %129, %130 : vector<4x1xf32>
    %132 = arith.mulf %126, %126 : vector<4x1xf32>
    %133 = arith.subf %131, %132 : vector<4x1xf32>
    %cst_61 = arith.constant 9.99999974E-6 : f32
    %134 = vector.broadcast %cst_61 : f32 to vector<4x1xf32>
    %135 = arith.addf %133, %134 : vector<4x1xf32>
    %136 = math.rsqrt %135 : vector<4x1xf32>
    %137 = arith.mulf %77, %136 : vector<4x1xf32>
    %138 = arith.mulf %126, %137 : vector<4x1xf32>
    %139 = arith.subf %78, %138 : vector<4x1xf32>
    %140 = vector.broadcast %137 : vector<4x1xf32> to vector<4x512xf32>
    %141 = arith.mulf %122, %140 : vector<4x512xf32>
    %142 = vector.broadcast %139 : vector<4x1xf32> to vector<4x512xf32>
    %143 = arith.addf %141, %142 : vector<4x512xf32>
    %cst_62 = arith.constant 1.000000e-01 : f32
    %144 = vector.broadcast %cst_62 : f32 to vector<4x512xf32>
    %145 = arith.mulf %144, %143 : vector<4x512xf32>
    %146 = arith.maximumf %143, %145 : vector<4x512xf32>
    %c0_63 = arith.constant 0 : index
    %c0_64 = arith.constant 0 : index
    %147 = vector.load %arg5[%c0_63, %c0_64] : memref<4x512xf32, #tpu.memory_space<vmem>>, vector<4x512xf32>
    tpu.vector_store %arg5[%c0_63, %c0_64], %146 {strides = array<i32>} : memref<4x512xf32, #tpu.memory_space<vmem>>, vector<4x512xf32>,
    return
  }
  func.func @transform_0(%arg0: i32) -> (i32, i32) {
    %c0_i32 = arith.constant 0 : i32
    %c0_i32_0 = arith.constant 0 : i32
    %c0_i32_1 = arith.constant 0 : i32
    return %c0_i32, %c0_i32_0 : i32, i32
  }
  func.func @transform_1(%arg0: i32) -> (i32, i32, i32) {
    %c0_i32 = arith.constant 0 : i32
    %c0_i32_0 = arith.constant 0 : i32
    %c0_i32_1 = arith.constant 0 : i32
    %c0_i32_2 = arith.constant 0 : i32
    return %c0_i32, %c0_i32_0, %c0_i32_1 : i32, i32, i32
  }
  func.func @transform_2(%arg0: i32) -> (i32, i32) {
    %c0_i32 = arith.constant 0 : i32
    %c0_i32_0 = arith.constant 0 : i32
    %c0_i32_1 = arith.constant 0 : i32
    return %c0_i32, %c0_i32_0 : i32, i32
  }
  func.func @transform_3(%arg0: i32) -> (i32, i32) {
    %c0_i32 = arith.constant 0 : i32
    %c0_i32_0 = arith.constant 0 : i32
    %c0_i32_1 = arith.constant 0 : i32
    return %c0_i32, %c0_i32_0 : i32, i32
  }
  func.func @transform_4(%arg0: i32) -> (i32, i32) {
    %c0_i32 = arith.constant 0 : i32
    %c0_i32_0 = arith.constant 0 : i32
    %c0_i32_1 = arith.constant 0 : i32
    return %c0_i32, %c0_i32_0 : i32, i32
  }
}

</mosaic_0001>

<llo_original>
// kernel: discriminator_usual_block.1
$region0: #{discriminator_usual_block.1}
  #allocation0 [shape = 'u32[]', space=smem, size = 0x4, offset = 0x4, fixed_abs, tag = 'smem constant byte address 0x4 - core index']
  #allocation1 [shape = 'u32[72,128]{1,0:T(1,128)}', space=vmem, size = 0x9000, scoped, tag = 'internal scratch']
  #allocation2 [shape = 'f32[36,512]{1,0:T(8,128)}', space=vmem, size = 0x14000, scoped, tag = 'scratch operand']
  %s0 = inlined_call_operand.vmem [shape: f32[4,512], index: 0, kind: input, shape index: {}]
  %s1 = inlined_call_operand.vmem [shape: bf16[2,4,36], index: 1, kind: input, shape index: {}]
  %s2 = inlined_call_operand.vmem [shape: f32[9,512], index: 2, kind: input, shape index: {}]
  %s3 = inlined_call_operand.vmem [shape: f32[4,4], index: 3, kind: input, shape index: {}]
  %s4 = inlined_call_operand.vmem [shape: f32[4,512], index: 4, kind: output, shape index: {}]
  %s5 = sld [smem:[#allocation0]]
  $region26: #{discriminator_usual_block.1} parent=0
    _
  %s7 = ssub.s32 1, %s5
  %s8 = scalar_select 0, %s7, %s5
  // Predicated region
  $region2: #{discriminator_usual_block.1} parent=0 // pred_check
    _
  $region3: #{discriminator_usual_block.1} parent=0 // pred_check_branch
    %10 = sbr.rel (0) target = $region5
  $region4: #{discriminator_usual_block.1} parent=0 // pred_region
    _
  $region5: #{discriminator_usual_block.1} parent=0 // pred_fallthru
    _
  // Predicated region
  $region6: #{discriminator_usual_block.1} parent=0 // pred_check
    _
  $region7: #{discriminator_usual_block.1} parent=0 // pred_check_branch
    %12 = sbr.rel (0) target = $region9
  $region8: #{discriminator_usual_block.1} parent=0 // pred_region
    _
  $region9: #{discriminator_usual_block.1} parent=0 // pred_fallthru
    _
  // Predicated region
  $region10: #{discriminator_usual_block.1} parent=0 // pred_check
    _
  $region11: #{discriminator_usual_block.1} parent=0 // pred_check_branch
    %14 = sbr.rel (0) target = $region13
  $region12: #{discriminator_usual_block.1} parent=0 // pred_region
    _
  $region13: #{discriminator_usual_block.1} parent=0 // pred_fallthru
    _
  // Predicated region
  $region14: #{discriminator_usual_block.1} parent=0 // pred_check
    _
  $region15: #{discriminator_usual_block.1} parent=0 // pred_check_branch
    %16 = sbr.rel (0) target = $region17
  $region16: #{discriminator_usual_block.1} parent=0 // pred_region
    _
  $region17: #{discriminator_usual_block.1} parent=0 // pred_fallthru
    _
  %v18 = vld [vmem:[%s2] sm:$0xff]
  %v19 = vld [vmem:[%s2 + $0x8] sm:$0xff]
  %v20 = vld [vmem:[%s2 + $0x10] sm:$0xff]
  %v21 = vld [vmem:[%s2 + $0x18] sm:$0xff]
  %v22 = vld [vmem:[%s2 + $0x20] sm:$0x1]
  %v23 = vld [vmem:[%s2 + $0x28] sm:$0x1]
  %v24 = vld [vmem:[%s2 + $0x30] sm:$0x1]
  %v25 = vld [vmem:[%s2 + $0x38] sm:$0x1]
  %v26 = vld [vmem:[%s3] sm:$0xf]
  %v27 = vld [vmem:[%s0] sm:$0xff]
  %v28 = vld [vmem:[%s0 + $0x8] sm:$0xff]
  %v29 = vld [vmem:[%s1] sm:$0x3]
  %32 = vst [vmem:[#allocation1] ss:$2 sm:$0xff] %v27
  %s33 = scalar_lea.vmem [#allocation1], 16
  %34 = vst [vmem:[%s33] ss:$2 sm:$0xff] %v28
  %v35 = vld.sshfl [vmem:[#allocation1] sm:$0xff pattern:$0x75316420]
  %v36 = vld.sshfl [vmem:[#allocation1 + $0x8] sm:$0xff pattern:$0x75316420]
  %v37 = vld.sshfl [vmem:[#allocation1 + $0x10] sm:$0xff pattern:$0x75316420]
  %v38 = vld.sshfl [vmem:[#allocation1 + $0x18] sm:$0xff pattern:$0x75316420]
  %43 = vrot.lane.b32.xlu0 %v35, 17
  %v44 = vpop.permute.xlu0 %43
  %45 = vrot.lane.b32.xlu0 %v36, 17
  %v46 = vpop.permute.xlu0 %45
  %47 = vrot.lane.b32.xlu0 %v37, 17
  %v48 = vpop.permute.xlu0 %47
  %49 = vrot.lane.b32.xlu0 %v38, 17
  %v50 = vpop.permute.xlu0 %49
  %v51 = vlaneseq
  %v52 = vand.u32 %v51, 127
  %vm53 = vcmp.lt.s32.totalorder %v52, 17
  %v54 = vsel %vm53, %v48, %v50
  %v55 = vsel %vm53, %v46, %v48
  %v56 = vsel %vm53, %v44, %v46
  %v57 = vsel %vm53, %v50, %v44
  %v58 = vperm.slane %v18, 0
  %v59 = vperm.slane %v19, 0
  %v60 = vperm.slane %v20, 0
  %v61 = vperm.slane %v21, 0
  %v62 = vmul.f32 %v57, %v58
  %v63 = vmul.f32 %v56, %v59
  %v64 = vmul.f32 %v55, %v60
  %v65 = vmul.f32 %v54, %v61
  %66 = vst [vmem:[#allocation2] sm:$0xf] %v62
  %67 = vst [vmem:[#allocation2 + $0x8] sm:$0xf] %v63
  %68 = vst [vmem:[#allocation2 + $0x10] sm:$0xf] %v64
  %69 = vst [vmem:[#allocation2 + $0x18] sm:$0xf] %v65
  %70 = vst [vmem:[#allocation1] ss:$2 sm:$0xff] %v27
  %s71 = scalar_lea.vmem [#allocation1], 16
  %72 = vst [vmem:[%s71] ss:$2 sm:$0xff] %v28
  %v73 = vld.sshfl [vmem:[#allocation1] sm:$0xff pattern:$0x75316420]
  %v74 = vld.sshfl [vmem:[#allocation1 + $0x8] sm:$0xff pattern:$0x75316420]
  %v75 = vld.sshfl [vmem:[#allocation1 + $0x10] sm:$0xff pattern:$0x75316420]
  %v76 = vld.sshfl [vmem:[#allocation1 + $0x18] sm:$0xff pattern:$0x75316420]
  %81 = vrot.lane.b32.xlu0 %v73, 16
  %v82 = vpop.permute.xlu0 %81
  %83 = vrot.lane.b32.xlu0 %v74, 16
  %v84 = vpop.permute.xlu0 %83
  %85 = vrot.lane.b32.xlu0 %v75, 16
  %v86 = vpop.permute.xlu0 %85
  %87 = vrot.lane.b32.xlu0 %v76, 16
  %v88 = vpop.permute.xlu0 %87
  %vm89 = vcmp.lt.s32.totalorder %v52, 16
  %v90 = vsel %vm89, %v86, %v88
  %v91 = vsel %vm89, %v84, %v86
  %v92 = vsel %vm89, %v82, %v84
  %v93 = vsel %vm89, %v88, %v82
  %v94 = vperm.slane %v18, 1
  %v95 = vperm.slane %v19, 1
  %v96 = vperm.slane %v20, 1
  %v97 = vperm.slane %v21, 1
  %v98 = vmul.f32 %v93, %v94
  %v99 = vmul.f32 %v92, %v95
  %v100 = vmul.f32 %v91, %v96
  %v101 = vmul.f32 %v90, %v97
  %v106 = vrot.slane %v98, 4
  %v107 = vrot.slane %v99, 4
  %v108 = vrot.slane %v100, 4
  %v109 = vrot.slane %v101, 4
  %114 = vst [vmem:[#allocation2] sm:$0xf0] %v106
  %115 = vst [vmem:[#allocation2 + $0x8] sm:$0xf0] %v107
  %116 = vst [vmem:[#allocation2 + $0x10] sm:$0xf0] %v108
  %117 = vst [vmem:[#allocation2 + $0x18] sm:$0xf0] %v109
  %118 = vst [vmem:[#allocation1] ss:$2 sm:$0xff] %v27
  %s119 = scalar_lea.vmem [#allocation1], 16
  %120 = vst [vmem:[%s119] ss:$2 sm:$0xff] %v28
  %v121 = vld.sshfl [vmem:[#allocation1] sm:$0xff pattern:$0x75316420]
  %v122 = vld.sshfl [vmem:[#allocation1 + $0x8] sm:$0xff pattern:$0x75316420]
  %v123 = vld.sshfl [vmem:[#allocation1 + $0x10] sm:$0xff pattern:$0x75316420]
  %v124 = vld.sshfl [vmem:[#allocation1 + $0x18] sm:$0xff pattern:$0x75316420]
  %129 = vrot.lane.b32.xlu0 %v121, 15
  %v130 = vpop.permute.xlu0 %129
  %131 = vrot.lane.b32.xlu0 %v122, 15
  %v132 = vpop.permute.xlu0 %131
  %133 = vrot.lane.b32.xlu0 %v123, 15
  %v134 = vpop.permute.xlu0 %133
  %135 = vrot.lane.b32.xlu0 %v124, 15
  %v136 = vpop.permute.xlu0 %135
  %vm137 = vcmp.lt.s32.totalorder %v52, 15
  %v138 = vsel %vm137, %v134, %v136
  %v139 = vsel %vm137, %v132, %v134
  %v140 = vsel %vm137, %v130, %v132
  %v141 = vsel %vm137, %v136, %v130
  %v142 = vperm.slane %v18, 2
  %v143 = vperm.slane %v19, 2
  %v144 = vperm.slane %v20, 2
  %v145 = vperm.slane %v21, 2
  %v146 = vmul.f32 %v141, %v142
  %v147 = vmul.f32 %v140, %v143
  %v148 = vmul.f32 %v139, %v144
  %v149 = vmul.f32 %v138, %v145
  %150 = vst [vmem:[#allocation2 + $0x20] sm:$0xf] %v146
  %151 = vst [vmem:[#allocation2 + $0x28] sm:$0xf] %v147
  %152 = vst [vmem:[#allocation2 + $0x30] sm:$0xf] %v148
  %153 = vst [vmem:[#allocation2 + $0x38] sm:$0xf] %v149
  %154 = vst [vmem:[#allocation1] ss:$2 sm:$0xff] %v27
  %s155 = scalar_lea.vmem [#allocation1], 16
  %156 = vst [vmem:[%s155] ss:$2 sm:$0xff] %v28
  %v157 = vld.sshfl [vmem:[#allocation1] sm:$0xff pattern:$0x75316420]
  %v158 = vld.sshfl [vmem:[#allocation1 + $0x8] sm:$0xff pattern:$0x75316420]
  %v159 = vld.sshfl [vmem:[#allocation1 + $0x10] sm:$0xff pattern:$0x75316420]
  %v160 = vld.sshfl [vmem:[#allocation1 + $0x18] sm:$0xff pattern:$0x75316420]
  %165 = vrot.lane.b32.xlu0 %v157, 1
  %v166 = vpop.permute.xlu0 %165
  %167 = vrot.lane.b32.xlu0 %v158, 1
  %v168 = vpop.permute.xlu0 %167
  %169 = vrot.lane.b32.xlu0 %v159, 1
  %v170 = vpop.permute.xlu0 %169
  %171 = vrot.lane.b32.xlu0 %v160, 1
  %v172 = vpop.permute.xlu0 %171
  %vm173 = vcmp.lt.s32.totalorder %v52, 1
  %v174 = vsel %vm173, %v170, %v172
  %v175 = vsel %vm173, %v168, %v170
  %v176 = vsel %vm173, %v166, %v168
  %v177 = vsel %vm173, %v172, %v166
  %v178 = vperm.slane %v18, 3
  %v179 = vperm.slane %v19, 3
  %v180 = vperm.slane %v20, 3
  %v181 = vperm.slane %v21, 3
  %v182 = vmul.f32 %v177, %v178
  %v183 = vmul.f32 %v176, %v179
  %v184 = vmul.f32 %v175, %v180
  %v185 = vmul.f32 %v174, %v181
  %v190 = vrot.slane %v182, 4
  %v191 = vrot.slane %v183, 4
  %v192 = vrot.slane %v184, 4
  %v193 = vrot.slane %v185, 4
  %198 = vst [vmem:[#allocation2 + $0x20] sm:$0xf0] %v190
  %199 = vst [vmem:[#allocation2 + $0x28] sm:$0xf0] %v191
  %200 = vst [vmem:[#allocation2 + $0x30] sm:$0xf0] %v192
  %201 = vst [vmem:[#allocation2 + $0x38] sm:$0xf0] %v193
  %202 = vst [vmem:[#allocation1] ss:$2 sm:$0xff] %v27
  %s203 = scalar_lea.vmem [#allocation1], 16
  %204 = vst [vmem:[%s203] ss:$2 sm:$0xff] %v28
  %v205 = vld.sshfl [vmem:[#allocation1] sm:$0xff pattern:$0x75316420]
  %v206 = vld.sshfl [vmem:[#allocation1 + $0x8] sm:$0xff pattern:$0x75316420]
  %v207 = vld.sshfl [vmem:[#allocation1 + $0x10] sm:$0xff pattern:$0x75316420]
  %v208 = vld.sshfl [vmem:[#allocation1 + $0x18] sm:$0xff pattern:$0x75316420]
  %213 = vst [vmem:[#allocation2 + $0x40] sm:$0xf] %v205
  %214 = vst [vmem:[#allocation2 + $0x48] sm:$0xf] %v206
  %215 = vst [vmem:[#allocation2 + $0x50] sm:$0xf] %v207
  %216 = vst [vmem:[#allocation2 + $0x58] sm:$0xf] %v208
  %217 = vst [vmem:[#allocation1] ss:$2 sm:$0xff] %v27
  %s218 = scalar_lea.vmem [#allocation1], 16
  %219 = vst [vmem:[%s218] ss:$2 sm:$0xff] %v28
  %v220 = vld.sshfl [vmem:[#allocation1] sm:$0xff pattern:$0x75316420]
  %v221 = vld.sshfl [vmem:[#allocation1 + $0x8] sm:$0xff pattern:$0x75316420]
  %v222 = vld.sshfl [vmem:[#allocation1 + $0x10] sm:$0xff pattern:$0x75316420]
  %v223 = vld.sshfl [vmem:[#allocation1 + $0x18] sm:$0xff pattern:$0x75316420]
  %228 = vrot.lane.b32.xlu0 %v220, 127
  %v229 = vpop.permute.xlu0 %228
  %230 = vrot.lane.b32.xlu0 %v221, 127
  %v231 = vpop.permute.xlu0 %230
  %232 = vrot.lane.b32.xlu0 %v222, 127
  %v233 = vpop.permute.xlu0 %232
  %234 = vrot.lane.b32.xlu0 %v223, 127
  %v235 = vpop.permute.xlu0 %234
  %vm236 = vcmp.lt.s32.totalorder %v52, 127
  %v237 = vsel %vm236, %v233, %v235
  %v238 = vsel %vm236, %v231, %v233
  %v239 = vsel %vm236, %v229, %v231
  %v240 = vsel %vm236, %v235, %v229
  %v241 = vperm.slane %v18, 5
  %v242 = vperm.slane %v19, 5
  %v243 = vperm.slane %v20, 5
  %v244 = vperm.slane %v21, 5
  %v245 = vmul.f32 %v239, %v241
  %v246 = vmul.f32 %v238, %v242
  %v247 = vmul.f32 %v237, %v243
  %v248 = vmul.f32 %v240, %v244
  %v253 = vrot.slane %v245, 4
  %v254 = vrot.slane %v246, 4
  %v255 = vrot.slane %v247, 4
  %v256 = vrot.slane %v248, 4
  %261 = vst [vmem:[#allocation2 + $0x40] sm:$0xf0] %v253
  %262 = vst [vmem:[#allocation2 + $0x48] sm:$0xf0] %v254
  %263 = vst [vmem:[#allocation2 + $0x50] sm:$0xf0] %v255
  %264 = vst [vmem:[#allocation2 + $0x58] sm:$0xf0] %v256
  %265 = vst [vmem:[#allocation1] ss:$2 sm:$0xff] %v27
  %s266 = scalar_lea.vmem [#allocation1], 16
  %267 = vst [vmem:[%s266] ss:$2 sm:$0xff] %v28
  %v268 = vld.sshfl [vmem:[#allocation1] sm:$0xff pattern:$0x75316420]
  %v269 = vld.sshfl [vmem:[#allocation1 + $0x8] sm:$0xff pattern:$0x75316420]
  %v270 = vld.sshfl [vmem:[#allocation1 + $0x10] sm:$0xff pattern:$0x75316420]
  %v271 = vld.sshfl [vmem:[#allocation1 + $0x18] sm:$0xff pattern:$0x75316420]
  %276 = vrot.lane.b32.xlu0 %v268, 113
  %v277 = vpop.permute.xlu0 %276
  %278 = vrot.lane.b32.xlu0 %v269, 113
  %v279 = vpop.permute.xlu0 %278
  %280 = vrot.lane.b32.xlu0 %v270, 113
  %v281 = vpop.permute.xlu0 %280
  %282 = vrot.lane.b32.xlu0 %v271, 113
  %v283 = vpop.permute.xlu0 %282
  %vm284 = vcmp.lt.s32.totalorder %v52, 113
  %v285 = vsel %vm284, %v281, %v283
  %v286 = vsel %vm284, %v279, %v281
  %v287 = vsel %vm284, %v277, %v279
  %v288 = vsel %vm284, %v283, %v277
  %v289 = vperm.slane %v18, 6
  %v290 = vperm.slane %v19, 6
  %v291 = vperm.slane %v20, 6
  %v292 = vperm.slane %v21, 6
  %v293 = vmul.f32 %v287, %v289
  %v294 = vmul.f32 %v286, %v290
  %v295 = vmul.f32 %v285, %v291
  %v296 = vmul.f32 %v288, %v292
  %297 = vst [vmem:[#allocation2 + $0x60] sm:$0xf] %v293
  %298 = vst [vmem:[#allocation2 + $0x68] sm:$0xf] %v294
  %299 = vst [vmem:[#allocation2 + $0x70] sm:$0xf] %v295
  %300 = vst [vmem:[#allocation2 + $0x78] sm:$0xf] %v296
  %301 = vst [vmem:[#allocation1] ss:$2 sm:$0xff] %v27
  %s302 = scalar_lea.vmem [#allocation1], 16
  %303 = vst [vmem:[%s302] ss:$2 sm:$0xff] %v28
  %v304 = vld.sshfl [vmem:[#allocation1] sm:$0xff pattern:$0x75316420]
  %v305 = vld.sshfl [vmem:[#allocation1 + $0x8] sm:$0xff pattern:$0x75316420]
  %v306 = vld.sshfl [vmem:[#allocation1 + $0x10] sm:$0xff pattern:$0x75316420]
  %v307 = vld.sshfl [vmem:[#allocation1 + $0x18] sm:$0xff pattern:$0x75316420]
  %312 = vrot.lane.b32.xlu0 %v304, 112
  %v313 = vpop.permute.xlu0 %312
  %314 = vrot.lane.b32.xlu0 %v305, 112
  %v315 = vpop.permute.xlu0 %314
  %316 = vrot.lane.b32.xlu0 %v306, 112
  %v317 = vpop.permute.xlu0 %316
  %318 = vrot.lane.b32.xlu0 %v307, 112
  %v319 = vpop.permute.xlu0 %318
  %vm320 = vcmp.lt.s32.totalorder %v52, 112
  %v321 = vsel %vm320, %v317, %v319
  %v322 = vsel %vm320, %v315, %v317
  %v323 = vsel %vm320, %v313, %v315
  %v324 = vsel %vm320, %v319, %v313
  %v325 = vperm.slane %v18, 7
  %v326 = vperm.slane %v19, 7
  %v327 = vperm.slane %v20, 7
  %v328 = vperm.slane %v21, 7
  %v329 = vmul.f32 %v323, %v325
  %v330 = vmul.f32 %v322, %v326
  %v331 = vmul.f32 %v321, %v327
  %v332 = vmul.f32 %v324, %v328
  %v337 = vrot.slane %v329, 4
  %v338 = vrot.slane %v330, 4
  %v339 = vrot.slane %v331, 4
  %v340 = vrot.slane %v332, 4
  %345 = vst [vmem:[#allocation2 + $0x60] sm:$0xf0] %v337
  %346 = vst [vmem:[#allocation2 + $0x68] sm:$0xf0] %v338
  %347 = vst [vmem:[#allocation2 + $0x70] sm:$0xf0] %v339
  %348 = vst [vmem:[#allocation2 + $0x78] sm:$0xf0] %v340
  %349 = vst [vmem:[#allocation1] ss:$2 sm:$0xff] %v27
  %s350 = scalar_lea.vmem [#allocation1], 16
  %351 = vst [vmem:[%s350] ss:$2 sm:$0xff] %v28
  %v352 = vld.sshfl [vmem:[#allocation1] sm:$0xff pattern:$0x75316420]
  %v353 = vld.sshfl [vmem:[#allocation1 + $0x8] sm:$0xff pattern:$0x75316420]
  %v354 = vld.sshfl [vmem:[#allocation1 + $0x10] sm:$0xff pattern:$0x75316420]
  %v355 = vld.sshfl [vmem:[#allocation1 + $0x18] sm:$0xff pattern:$0x75316420]
  %360 = vrot.lane.b32.xlu0 %v352, 111
  %v361 = vpop.permute.xlu0 %360
  %362 = vrot.lane.b32.xlu0 %v353, 111
  %v363 = vpop.permute.xlu0 %362
  %364 = vrot.lane.b32.xlu0 %v354, 111
  %v365 = vpop.permute.xlu0 %364
  %366 = vrot.lane.b32.xlu0 %v355, 111
  %v367 = vpop.permute.xlu0 %366
  %vm368 = vcmp.lt.s32.totalorder %v52, 111
  %v369 = vsel %vm368, %v365, %v367
  %v370 = vsel %vm368, %v363, %v365
  %v371 = vsel %vm368, %v361, %v363
  %v372 = vsel %vm368, %v367, %v361
  %v373 = vperm.slane %v22, 0
  %v374 = vperm.slane %v23, 0
  %v375 = vperm.slane %v24, 0
  %v376 = vperm.slane %v25, 0
  %v377 = vmul.f32 %v371, %v373
  %v378 = vmul.f32 %v370, %v374
  %v379 = vmul.f32 %v369, %v375
  %v380 = vmul.f32 %v372, %v376
  %381 = vst [vmem:[#allocation2 + $0x80] sm:$0xf] %v377
  %382 = vst [vmem:[#allocation2 + $0x88] sm:$0xf] %v378
  %383 = vst [vmem:[#allocation2 + $0x90] sm:$0xf] %v379
  %384 = vst [vmem:[#allocation2 + $0x98] sm:$0xf] %v380
  %v385 = vld [vmem:[#allocation2] sm:$0xff]
  %v386 = vld [vmem:[#allocation2 + $0x8] sm:$0xff]
  %v387 = vld [vmem:[#allocation2 + $0x10] sm:$0xff]
  %v388 = vld [vmem:[#allocation2 + $0x18] sm:$0xff]
  %v389 = vld [vmem:[#allocation2 + $0x20] sm:$0xff]
  %v390 = vld [vmem:[#allocation2 + $0x28] sm:$0xff]
  %v391 = vld [vmem:[#allocation2 + $0x30] sm:$0xff]
  %v392 = vld [vmem:[#allocation2 + $0x38] sm:$0xff]
  %v393 = vld [vmem:[#allocation2 + $0x40] sm:$0xff]
  %v394 = vld [vmem:[#allocation2 + $0x48] sm:$0xff]
  %v395 = vld [vmem:[#allocation2 + $0x50] sm:$0xff]
  %v396 = vld [vmem:[#allocation2 + $0x58] sm:$0xff]
  %v397 = vld [vmem:[#allocation2 + $0x60] sm:$0xff]
  %v398 = vld [vmem:[#allocation2 + $0x68] sm:$0xff]
  %v399 = vld [vmem:[#allocation2 + $0x70] sm:$0xff]
  %v400 = vld [vmem:[#allocation2 + $0x78] sm:$0xff]
  %v401 = vld [vmem:[#allocation2 + $0x80] sm:$0xf]
  %v402 = vld [vmem:[#allocation2 + $0x88] sm:$0xf]
  %v403 = vld [vmem:[#allocation2 + $0x90] sm:$0xf]
  %v404 = vld [vmem:[#allocation2 + $0x98] sm:$0xf]
  %v405 = vpack.c.bf16 %v389, %v385
  %v406 = vpack.c.bf16 %v390, %v386
  %v407 = vpack.c.bf16 %v391, %v387
  %v408 = vpack.c.bf16 %v392, %v388
  %v409 = vpack.c.bf16 %v397, %v393
  %v410 = vpack.c.bf16 %v398, %v394
  %v411 = vpack.c.bf16 %v399, %v395
  %v412 = vpack.c.bf16 %v400, %v396
  %v413 = vpack.c.bf16 %v401, %v401
  %v414 = vpack.c.bf16 %v402, %v402
  %v415 = vpack.c.bf16 %v403, %v403
  %v416 = vpack.c.bf16 %v404, %v404
  %vm417 = vcmask 293888
  %v419 = vsel %vm417, %v29, 0
  %vm421 = vcmask 1041408
  %v423 = vsel %vm421, %v413, 0
  %v426 = vsel %vm421, %v414, 0
  %v429 = vsel %vm421, %v415, 0
  %v432 = vsel %vm421, %v416, 0
  %434 = vmatpush.bf16.msra.mxu0 0
  %435 = vmatpush.bf16.msra.mxu0 0
  %436 = vmatpush.bf16.msra.mxu0 0
  %437 = vmatpush.bf16.msra.mxu0 0
  %438 = vmatpush.bf16.msra.mxu0 0
  %439 = vmatpush.bf16.msra.mxu0 %v423
  %440 = vmatpush.bf16.msra.mxu0 %v409
  %441 = vmatpush.bf16.msra.mxu0 %v405
  %442 = vmatmul.bf16.gmra.mxu0 %v419
  %v443 = vpop.f32.mrf.mxu0
  %v444 = vadd.f32 0.0, %v443
  %v445 = vpop.f32.mrf.mxu0
  %446 = vdwg.mxu0
  %447 = vmatpush.bf16.msra.mxu0 0
  %448 = vmatpush.bf16.msra.mxu0 0
  %449 = vmatpush.bf16.msra.mxu0 0
  %450 = vmatpush.bf16.msra.mxu0 0
  %451 = vmatpush.bf16.msra.mxu0 0
  %452 = vmatpush.bf16.msra.mxu0 %v426
  %453 = vmatpush.bf16.msra.mxu0 %v410
  %454 = vmatpush.bf16.msra.mxu0 %v406
  %455 = vmatmul.bf16.gmra.mxu0 %v419
  %v456 = vpop.f32.mrf.mxu0
  %v457 = vadd.f32 0.0, %v456
  %v458 = vpop.f32.mrf.mxu0
  %459 = vdwg.mxu0
  %460 = vmatpush.bf16.msra.mxu0 0
  %461 = vmatpush.bf16.msra.mxu0 0
  %462 = vmatpush.bf16.msra.mxu0 0
  %463 = vmatpush.bf16.msra.mxu0 0
  %464 = vmatpush.bf16.msra.mxu0 0
  %465 = vmatpush.bf16.msra.mxu0 %v429
  %466 = vmatpush.bf16.msra.mxu0 %v411
  %467 = vmatpush.bf16.msra.mxu0 %v407
  %468 = vmatmul.bf16.gmra.mxu0 %v419
  %v469 = vpop.f32.mrf.mxu0
  %v470 = vadd.f32 0.0, %v469
  %v471 = vpop.f32.mrf.mxu0
  %472 = vdwg.mxu0
  %473 = vmatpush.bf16.msra.mxu0 0
  %474 = vmatpush.bf16.msra.mxu0 0
  %475 = vmatpush.bf16.msra.mxu0 0
  %476 = vmatpush.bf16.msra.mxu0 0
  %477 = vmatpush.bf16.msra.mxu0 0
  %478 = vmatpush.bf16.msra.mxu0 %v432
  %479 = vmatpush.bf16.msra.mxu0 %v412
  %480 = vmatpush.bf16.msra.mxu0 %v408
  %481 = vmatmul.bf16.gmra.mxu0 %v419
  %v482 = vpop.f32.mrf.mxu0
  %v483 = vadd.f32 0.0, %v482
  %v484 = vpop.f32.mrf.mxu0
  %485 = vdwg.mxu0
  %vm486 = vcmask 1043456
  %v487 = vsel %vm486, %v444, 0.0
  %v488 = vsel %vm486, %v457, 0.0
  %v489 = vadd.f32 %v487, %v488
  %v490 = vsel %vm486, %v470, 0.0
  %v491 = vadd.f32 %v489, %v490
  %v492 = vsel %vm486, %v483, 0.0
  %v493 = vadd.f32 %v491, %v492
  %494 = vadd.xlane.f32.xlu0 %v493
  %v495 = vpop.xlane.xlu0 %494
  %v496 = vmul.f32 %v495, 0.001953125
  %v497 = vmul.f32 %v444, %v444
  %v498 = vmul.f32 %v457, %v457
  %v499 = vmul.f32 %v470, %v470
  %v500 = vmul.f32 %v483, %v483
  %v501 = vsel %vm486, %v497, 0.0
  %v502 = vsel %vm486, %v498, 0.0
  %v503 = vadd.f32 %v501, %v502
  %v504 = vsel %vm486, %v499, 0.0
  %v505 = vadd.f32 %v503, %v504
  %v506 = vsel %vm486, %v500, 0.0
  %v507 = vadd.f32 %v505, %v506
  %508 = vadd.xlane.f32.xlu0 %v507
  %v509 = vpop.xlane.xlu0 %508
  %v510 = vmul.f32 %v509, 0.001953125
  %v511 = vmul.f32 %v496, %v496
  %v512 = vsub.f32 %v510, %v511
  %v513 = vadd.f32 %v512, 1e-05
  %v514 = vrsqrt.pop %v513
  %v515 = vmul.f32 %v514, %v513
  %v516 = vmul.f32 %v515, %v514
  %v517 = vmul.f32 0.5, %v516
  %v518 = vsub.f32 1.5, %v517
  %v519 = vmul.f32 %v514, %v518
  %vm520 = vweird.f32 %v513
  %vm521 = vweird.f32 %v514
  %vm522 = vmor %vm520, %vm521
  %v523 = vsel %vm522, %v514, %v519
  %v524 = vmul.f32 %v26, %v523
  %v525 = vmul.f32 %v496, %v524
  %527 = vrot.lane.b32.xlu0 %v525, 1
  %v528 = vpop.permute.xlu0 %527
  %v530 = vsub.f32 %v26, %v528
  %532 = vset.pattern.permute.xlu0 0
  %533 = vperm.xlu0 %532, %v524
  %v534 = vpop.permute.xlu0 %533
  %v536 = vmul.f32 %v444, %v534
  %v537 = vmul.f32 %v457, %v534
  %v538 = vmul.f32 %v470, %v534
  %v539 = vmul.f32 %v483, %v534
  %541 = vset.pattern.permute.xlu0 1
  %542 = vperm.xlu0 %541, %v530
  %v543 = vpop.permute.xlu0 %542
  %v545 = vadd.f32 %v536, %v543
  %v546 = vadd.f32 %v537, %v543
  %v547 = vadd.f32 %v538, %v543
  %v548 = vadd.f32 %v539, %v543
  %v549 = vmul.f32 %v545, 0.1
  %v550 = vmul.f32 %v546, 0.1
  %v551 = vmul.f32 %v547, 0.1
  %v552 = vmul.f32 %v548, 0.1
  %v553 = vmax.f32 %v545, %v549
  %v554 = vmax.f32 %v546, %v550
  %v555 = vmax.f32 %v547, %v551
  %v556 = vmax.f32 %v548, %v552
  %s557 = scalar_lea.vmem %s1, 2
  %v558 = vld [vmem:[%s557] sm:$0x3]
  %559 = vrot.lane.b32.xlu0 %v553, 17
  %v560 = vpop.permute.xlu0 %559
  %561 = vrot.lane.b32.xlu0 %v554, 17
  %v562 = vpop.permute.xlu0 %561
  %563 = vrot.lane.b32.xlu0 %v555, 17
  %v564 = vpop.permute.xlu0 %563
  %565 = vrot.lane.b32.xlu0 %v556, 17
  %v566 = vpop.permute.xlu0 %565
  %v567 = vsel %vm53, %v564, %v566
  %v568 = vsel %vm53, %v562, %v564
  %v569 = vsel %vm53, %v560, %v562
  %v570 = vsel %vm53, %v566, %v560
  %v571 = vmul.f32 %v570, %v58
  %v572 = vmul.f32 %v569, %v59
  %v573 = vmul.f32 %v568, %v60
  %v574 = vmul.f32 %v567, %v61
  %575 = vst [vmem:[#allocation2] sm:$0xf] %v571
  %576 = vst [vmem:[#allocation2 + $0x8] sm:$0xf] %v572
  %577 = vst [vmem:[#allocation2 + $0x10] sm:$0xf] %v573
  %578 = vst [vmem:[#allocation2 + $0x18] sm:$0xf] %v574
  %579 = vrot.lane.b32.xlu0 %v553, 16
  %v580 = vpop.permute.xlu0 %579
  %581 = vrot.lane.b32.xlu0 %v554, 16
  %v582 = vpop.permute.xlu0 %581
  %583 = vrot.lane.b32.xlu0 %v555, 16
  %v584 = vpop.permute.xlu0 %583
  %585 = vrot.lane.b32.xlu0 %v556, 16
  %v586 = vpop.permute.xlu0 %585
  %v587 = vsel %vm89, %v584, %v586
  %v588 = vsel %vm89, %v582, %v584
  %v589 = vsel %vm89, %v580, %v582
  %v590 = vsel %vm89, %v586, %v580
  %v591 = vmul.f32 %v590, %v94
  %v592 = vmul.f32 %v589, %v95
  %v593 = vmul.f32 %v588, %v96
  %v594 = vmul.f32 %v587, %v97
  %v599 = vrot.slane %v591, 4
  %v600 = vrot.slane %v592, 4
  %v601 = vrot.slane %v593, 4
  %v602 = vrot.slane %v594, 4
  %607 = vst [vmem:[#allocation2] sm:$0xf0] %v599
  %608 = vst [vmem:[#allocation2 + $0x8] sm:$0xf0] %v600
  %609 = vst [vmem:[#allocation2 + $0x10] sm:$0xf0] %v601
  %610 = vst [vmem:[#allocation2 + $0x18] sm:$0xf0] %v602
  %611 = vrot.lane.b32.xlu0 %v553, 15
  %v612 = vpop.permute.xlu0 %611
  %613 = vrot.lane.b32.xlu0 %v554, 15
  %v614 = vpop.permute.xlu0 %613
  %615 = vrot.lane.b32.xlu0 %v555, 15
  %v616 = vpop.permute.xlu0 %615
  %617 = vrot.lane.b32.xlu0 %v556, 15
  %v618 = vpop.permute.xlu0 %617
  %v619 = vsel %vm137, %v616, %v618
  %v620 = vsel %vm137, %v614, %v616
  %v621 = vsel %vm137, %v612, %v614
  %v622 = vsel %vm137, %v618, %v612
  %v623 = vmul.f32 %v622, %v142
  %v624 = vmul.f32 %v621, %v143
  %v625 = vmul.f32 %v620, %v144
  %v626 = vmul.f32 %v619, %v145
  %627 = vst [vmem:[#allocation2 + $0x20] sm:$0xf] %v623
  %628 = vst [vmem:[#allocation2 + $0x28] sm:$0xf] %v624
  %629 = vst [vmem:[#allocation2 + $0x30] sm:$0xf] %v625
  %630 = vst [vmem:[#allocation2 + $0x38] sm:$0xf] %v626
  %631 = vrot.lane.b32.xlu0 %v553, 1
  %v632 = vpop.permute.xlu0 %631
  %633 = vrot.lane.b32.xlu0 %v554, 1
  %v634 = vpop.permute.xlu0 %633
  %635 = vrot.lane.b32.xlu0 %v555, 1
  %v636 = vpop.permute.xlu0 %635
  %637 = vrot.lane.b32.xlu0 %v556, 1
  %v638 = vpop.permute.xlu0 %637
  %v639 = vsel %vm173, %v636, %v638
  %v640 = vsel %vm173, %v634, %v636
  %v641 = vsel %vm173, %v632, %v634
  %v642 = vsel %vm173, %v638, %v632
  %v643 = vmul.f32 %v642, %v178
  %v644 = vmul.f32 %v641, %v179
  %v645 = vmul.f32 %v640, %v180
  %v646 = vmul.f32 %v639, %v181
  %v651 = vrot.slane %v643, 4
  %v652 = vrot.slane %v644, 4
  %v653 = vrot.slane %v645, 4
  %v654 = vrot.slane %v646, 4
  %659 = vst [vmem:[#allocation2 + $0x20] sm:$0xf0] %v651
  %660 = vst [vmem:[#allocation2 + $0x28] sm:$0xf0] %v652
  %661 = vst [vmem:[#allocation2 + $0x30] sm:$0xf0] %v653
  %662 = vst [vmem:[#allocation2 + $0x38] sm:$0xf0] %v654
  %663 = vst [vmem:[#allocation2 + $0x40] sm:$0xf] %v553
  %664 = vst [vmem:[#allocation2 + $0x48] sm:$0xf] %v554
  %665 = vst [vmem:[#allocation2 + $0x50] sm:$0xf] %v555
  %666 = vst [vmem:[#allocation2 + $0x58] sm:$0xf] %v556
  %667 = vrot.lane.b32.xlu0 %v553, 127
  %v668 = vpop.permute.xlu0 %667
  %669 = vrot.lane.b32.xlu0 %v554, 127
  %v670 = vpop.permute.xlu0 %669
  %671 = vrot.lane.b32.xlu0 %v555, 127
  %v672 = vpop.permute.xlu0 %671
  %673 = vrot.lane.b32.xlu0 %v556, 127
  %v674 = vpop.permute.xlu0 %673
  %v675 = vsel %vm236, %v672, %v674
  %v676 = vsel %vm236, %v670, %v672
  %v677 = vsel %vm236, %v668, %v670
  %v678 = vsel %vm236, %v674, %v668
  %v679 = vmul.f32 %v677, %v241
  %v680 = vmul.f32 %v676, %v242
  %v681 = vmul.f32 %v675, %v243
  %v682 = vmul.f32 %v678, %v244
  %v687 = vrot.slane %v679, 4
  %v688 = vrot.slane %v680, 4
  %v689 = vrot.slane %v681, 4
  %v690 = vrot.slane %v682, 4
  %695 = vst [vmem:[#allocation2 + $0x40] sm:$0xf0] %v687
  %696 = vst [vmem:[#allocation2 + $0x48] sm:$0xf0] %v688
  %697 = vst [vmem:[#allocation2 + $0x50] sm:$0xf0] %v689
  %698 = vst [vmem:[#allocation2 + $0x58] sm:$0xf0] %v690
  %699 = vrot.lane.b32.xlu0 %v553, 113
  %v700 = vpop.permute.xlu0 %699
  %701 = vrot.lane.b32.xlu0 %v554, 113
  %v702 = vpop.permute.xlu0 %701
  %703 = vrot.lane.b32.xlu0 %v555, 113
  %v704 = vpop.permute.xlu0 %703
  %705 = vrot.lane.b32.xlu0 %v556, 113
  %v706 = vpop.permute.xlu0 %705
  %v707 = vsel %vm284, %v704, %v706
  %v708 = vsel %vm284, %v702, %v704
  %v709 = vsel %vm284, %v700, %v702
  %v710 = vsel %vm284, %v706, %v700
  %v711 = vmul.f32 %v709, %v289
  %v712 = vmul.f32 %v708, %v290
  %v713 = vmul.f32 %v707, %v291
  %v714 = vmul.f32 %v710, %v292
  %715 = vst [vmem:[#allocation2 + $0x60] sm:$0xf] %v711
  %716 = vst [vmem:[#allocation2 + $0x68] sm:$0xf] %v712
  %717 = vst [vmem:[#allocation2 + $0x70] sm:$0xf] %v713
  %718 = vst [vmem:[#allocation2 + $0x78] sm:$0xf] %v714
  %719 = vrot.lane.b32.xlu0 %v553, 112
  %v720 = vpop.permute.xlu0 %719
  %721 = vrot.lane.b32.xlu0 %v554, 112
  %v722 = vpop.permute.xlu0 %721
  %723 = vrot.lane.b32.xlu0 %v555, 112
  %v724 = vpop.permute.xlu0 %723
  %725 = vrot.lane.b32.xlu0 %v556, 112
  %v726 = vpop.permute.xlu0 %725
  %v727 = vsel %vm320, %v724, %v726
  %v728 = vsel %vm320, %v722, %v724
  %v729 = vsel %vm320, %v720, %v722
  %v730 = vsel %vm320, %v726, %v720
  %v731 = vmul.f32 %v729, %v325
  %v732 = vmul.f32 %v728, %v326
  %v733 = vmul.f32 %v727, %v327
  %v734 = vmul.f32 %v730, %v328
  %v739 = vrot.slane %v731, 4
  %v740 = vrot.slane %v732, 4
  %v741 = vrot.slane %v733, 4
  %v742 = vrot.slane %v734, 4
  %747 = vst [vmem:[#allocation2 + $0x60] sm:$0xf0] %v739
  %748 = vst [vmem:[#allocation2 + $0x68] sm:$0xf0] %v740
  %749 = vst [vmem:[#allocation2 + $0x70] sm:$0xf0] %v741
  %750 = vst [vmem:[#allocation2 + $0x78] sm:$0xf0] %v742
  %751 = vrot.lane.b32.xlu0 %v553, 111
  %v752 = vpop.permute.xlu0 %751
  %753 = vrot.lane.b32.xlu0 %v554, 111
  %v754 = vpop.permute.xlu0 %753
  %755 = vrot.lane.b32.xlu0 %v555, 111
  %v756 = vpop.permute.xlu0 %755
  %757 = vrot.lane.b32.xlu0 %v556, 111
  %v758 = vpop.permute.xlu0 %757
  %v759 = vsel %vm368, %v756, %v758
  %v760 = vsel %vm368, %v754, %v756
  %v761 = vsel %vm368, %v752, %v754
  %v762 = vsel %vm368, %v758, %v752
  %v763 = vmul.f32 %v761, %v373
  %v764 = vmul.f32 %v760, %v374
  %v765 = vmul.f32 %v759, %v375
  %v766 = vmul.f32 %v762, %v376
  %767 = vst [vmem:[#allocation2 + $0x80] sm:$0xf] %v763
  %768 = vst [vmem:[#allocation2 + $0x88] sm:$0xf] %v764
  %769 = vst [vmem:[#allocation2 + $0x90] sm:$0xf] %v765
  %770 = vst [vmem:[#allocation2 + $0x98] sm:$0xf] %v766
  %v771 = vld [vmem:[#allocation2] sm:$0xff]
  %v772 = vld [vmem:[#allocation2 + $0x8] sm:$0xff]
  %v773 = vld [vmem:[#allocation2 + $0x10] sm:$0xff]
  %v774 = vld [vmem:[#allocation2 + $0x18] sm:$0xff]
  %v775 = vld [vmem:[#allocation2 + $0x20] sm:$0xff]
  %v776 = vld [vmem:[#allocation2 + $0x28] sm:$0xff]
  %v777 = vld [vmem:[#allocation2 + $0x30] sm:$0xff]
  %v778 = vld [vmem:[#allocation2 + $0x38] sm:$0xff]
  %v779 = vld [vmem:[#allocation2 + $0x40] sm:$0xff]
  %v780 = vld [vmem:[#allocation2 + $0x48] sm:$0xff]
  %v781 = vld [vmem:[#allocation2 + $0x50] sm:$0xff]
  %v782 = vld [vmem:[#allocation2 + $0x58] sm:$0xff]
  %v783 = vld [vmem:[#allocation2 + $0x60] sm:$0xff]
  %v784 = vld [vmem:[#allocation2 + $0x68] sm:$0xff]
  %v785 = vld [vmem:[#allocation2 + $0x70] sm:$0xff]
  %v786 = vld [vmem:[#allocation2 + $0x78] sm:$0xff]
  %v787 = vld [vmem:[#allocation2 + $0x80] sm:$0xf]
  %v788 = vld [vmem:[#allocation2 + $0x88] sm:$0xf]
  %v789 = vld [vmem:[#allocation2 + $0x90] sm:$0xf]
  %v790 = vld [vmem:[#allocation2 + $0x98] sm:$0xf]
  %v791 = vpack.c.bf16 %v775, %v771
  %v792 = vpack.c.bf16 %v776, %v772
  %v793 = vpack.c.bf16 %v777, %v773
  %v794 = vpack.c.bf16 %v778, %v774
  %v795 = vpack.c.bf16 %v783, %v779
  %v796 = vpack.c.bf16 %v784, %v780
  %v797 = vpack.c.bf16 %v785, %v781
  %v798 = vpack.c.bf16 %v786, %v782
  %v799 = vpack.c.bf16 %v787, %v787
  %v800 = vpack.c.bf16 %v788, %v788
  %v801 = vpack.c.bf16 %v789, %v789
  %v802 = vpack.c.bf16 %v790, %v790
  %v804 = vsel %vm417, %v558, 0
  %v807 = vsel %vm421, %v799, 0
  %v810 = vsel %vm421, %v800, 0
  %v813 = vsel %vm421, %v801, 0
  %v816 = vsel %vm421, %v802, 0
  %818 = vmatpush.bf16.msra.mxu0 0
  %819 = vmatpush.bf16.msra.mxu0 0
  %820 = vmatpush.bf16.msra.mxu0 0
  %821 = vmatpush.bf16.msra.mxu0 0
  %822 = vmatpush.bf16.msra.mxu0 0
  %823 = vmatpush.bf16.msra.mxu0 %v807
  %824 = vmatpush.bf16.msra.mxu0 %v795
  %825 = vmatpush.bf16.msra.mxu0 %v791
  %826 = vmatmul.bf16.gmra.mxu0 %v804
  %v827 = vpop.f32.mrf.mxu0
  %v828 = vadd.f32 0.0, %v827
  %v829 = vpop.f32.mrf.mxu0
  %830 = vdwg.mxu0
  %831 = vmatpush.bf16.msra.mxu0 0
  %832 = vmatpush.bf16.msra.mxu0 0
  %833 = vmatpush.bf16.msra.mxu0 0
  %834 = vmatpush.bf16.msra.mxu0 0
  %835 = vmatpush.bf16.msra.mxu0 0
  %836 = vmatpush.bf16.msra.mxu0 %v810
  %837 = vmatpush.bf16.msra.mxu0 %v796
  %838 = vmatpush.bf16.msra.mxu0 %v792
  %839 = vmatmul.bf16.gmra.mxu0 %v804
  %v840 = vpop.f32.mrf.mxu0
  %v841 = vadd.f32 0.0, %v840
  %v842 = vpop.f32.mrf.mxu0
  %843 = vdwg.mxu0
  %844 = vmatpush.bf16.msra.mxu0 0
  %845 = vmatpush.bf16.msra.mxu0 0
  %846 = vmatpush.bf16.msra.mxu0 0
  %847 = vmatpush.bf16.msra.mxu0 0
  %848 = vmatpush.bf16.msra.mxu0 0
  %849 = vmatpush.bf16.msra.mxu0 %v813
  %850 = vmatpush.bf16.msra.mxu0 %v797
  %851 = vmatpush.bf16.msra.mxu0 %v793
  %852 = vmatmul.bf16.gmra.mxu0 %v804
  %v853 = vpop.f32.mrf.mxu0
  %v854 = vadd.f32 0.0, %v853
  %v855 = vpop.f32.mrf.mxu0
  %856 = vdwg.mxu0
  %857 = vmatpush.bf16.msra.mxu0 0
  %858 = vmatpush.bf16.msra.mxu0 0
  %859 = vmatpush.bf16.msra.mxu0 0
  %860 = vmatpush.bf16.msra.mxu0 0
  %861 = vmatpush.bf16.msra.mxu0 0
  %862 = vmatpush.bf16.msra.mxu0 %v816
  %863 = vmatpush.bf16.msra.mxu0 %v798
  %864 = vmatpush.bf16.msra.mxu0 %v794
  %865 = vmatmul.bf16.gmra.mxu0 %v804
  %v866 = vpop.f32.mrf.mxu0
  %v867 = vadd.f32 0.0, %v866
  %v868 = vpop.f32.mrf.mxu0
  %869 = vdwg.mxu0
  %v870 = vsel %vm486, %v828, 0.0
  %v871 = vsel %vm486, %v841, 0.0
  %v872 = vadd.f32 %v870, %v871
  %v873 = vsel %vm486, %v854, 0.0
  %v874 = vadd.f32 %v872, %v873
  %v875 = vsel %vm486, %v867, 0.0
  %v876 = vadd.f32 %v874, %v875
  %877 = vadd.xlane.f32.xlu0 %v876
  %v878 = vpop.xlane.xlu0 %877
  %v879 = vmul.f32 %v878, 0.001953125
  %v880 = vmul.f32 %v828, %v828
  %v881 = vmul.f32 %v841, %v841
  %v882 = vmul.f32 %v854, %v854
  %v883 = vmul.f32 %v867, %v867
  %v884 = vsel %vm486, %v880, 0.0
  %v885 = vsel %vm486, %v881, 0.0
  %v886 = vadd.f32 %v884, %v885
  %v887 = vsel %vm486, %v882, 0.0
  %v888 = vadd.f32 %v886, %v887
  %v889 = vsel %vm486, %v883, 0.0
  %v890 = vadd.f32 %v888, %v889
  %891 = vadd.xlane.f32.xlu0 %v890
  %v892 = vpop.xlane.xlu0 %891
  %v893 = vmul.f32 %v892, 0.001953125
  %v894 = vmul.f32 %v879, %v879
  %v895 = vsub.f32 %v893, %v894
  %v896 = vadd.f32 %v895, 1e-05
  %v897 = vrsqrt.pop %v896
  %v898 = vmul.f32 %v897, %v896
  %v899 = vmul.f32 %v898, %v897
  %v900 = vmul.f32 0.5, %v899
  %v901 = vsub.f32 1.5, %v900
  %v902 = vmul.f32 %v897, %v901
  %vm903 = vweird.f32 %v896
  %vm904 = vweird.f32 %v897
  %vm905 = vmor %vm903, %vm904
  %v906 = vsel %vm905, %v897, %v902
  %v907 = vmul.f32 %v26, %v906
  %v908 = vmul.f32 %v879, %v907
  %910 = vrot.lane.b32.xlu0 %v908, 1
  %v911 = vpop.permute.xlu0 %910
  %v913 = vsub.f32 %v26, %v911
  %915 = vset.pattern.permute.xlu0 2
  %916 = vperm.xlu0 %915, %v907
  %v917 = vpop.permute.xlu0 %916
  %v919 = vmul.f32 %v828, %v917
  %v920 = vmul.f32 %v841, %v917
  %v921 = vmul.f32 %v854, %v917
  %v922 = vmul.f32 %v867, %v917
  %924 = vset.pattern.permute.xlu0 3
  %925 = vperm.xlu0 %924, %v913
  %v926 = vpop.permute.xlu0 %925
  %v928 = vadd.f32 %v919, %v926
  %v929 = vadd.f32 %v920, %v926
  %v930 = vadd.f32 %v921, %v926
  %v931 = vadd.f32 %v922, %v926
  %v932 = vmul.f32 %v928, 0.1
  %v933 = vmul.f32 %v929, 0.1
  %v934 = vmul.f32 %v930, 0.1
  %v935 = vmul.f32 %v931, 0.1
  %v936 = vmax.f32 %v928, %v932
  %v937 = vmax.f32 %v929, %v933
  %v938 = vmax.f32 %v930, %v934
  %v939 = vmax.f32 %v931, %v935
  %v944 = vrot.slane %v937, 4
  %v945 = vrot.slane %v939, 4
  %v946 = vsel %vm486, %v936, %v944
  %v947 = vsel %vm486, %v938, %v945
  %950 = vst [vmem:[%s4] sm:$0xff] %v946
  %951 = vst [vmem:[%s4 + $0x8] sm:$0xff] %v947
  // Predicated region
  $region18: #{discriminator_usual_block.1} parent=0 // pred_check
    _
  $region19: #{discriminator_usual_block.1} parent=0 // pred_check_branch
    %953 = sbr.rel (0) target = $region21
  $region20: #{discriminator_usual_block.1} parent=0 // pred_region
    _
  $region21: #{discriminator_usual_block.1} parent=0 // pred_fallthru
    _
  // Predicated region
  $region22: #{discriminator_usual_block.1} parent=0 // pred_check
    _
  $region23: #{discriminator_usual_block.1} parent=0 // pred_check_branch
    %955 = sbr.rel (0) target = $region25
  $region24: #{discriminator_usual_block.1} parent=0 // pred_region
    _
  $region25: #{discriminator_usual_block.1} parent=0 // pred_fallthru
    _

</llo_original>
